<compile_context>
chip_gen: v7x
topology: tpu7x:2x2x1
jax: 0.10.0
libtpu: 0.0.40
codegen_flags: <defaults>
</compile_context>

<pallas_src>
import jax
import jax.numpy as jnp
from jax.experimental import pallas as pl
from jax.experimental.pallas import tpu as pltpu

_NPAD = 8  # padded width of the 3-wide head output (full-extent last dim)


def _round_up(n, m):
    return ((n + m - 1) // m) * m


def _sreg_head_kernel(mc_ref, x_ref, w1_ref, b1_ref, w2_ref, b2_ref, o_ref):
    """relu(relu(x @ W1 + b1) @ W2pad + b2pad) + min_center  (8-wide output)."""
    x = x_ref[...]                                               # [TB, C] (dropout = identity, eval)
    h = jnp.dot(x, w1_ref[...],
                preferred_element_type=jnp.float32) + b1_ref[...]  # [TB, 2C] f32
    h = jnp.maximum(h, 0.0)
    y = jnp.dot(h, w2_ref[...],
                preferred_element_type=jnp.float32) + b2_ref[...]  # [TB, 8] f32
    y = jnp.maximum(y, 0.0)
    o_ref[...] = y + mc_ref[0, 0]


def prepare_params(w1, b1, w2, b2):
    """One-time param prep (hoisted out of the per-call path): pad the tiny
    (2C, 3) head to (2C, 8) so the kernel output last dim is full-extent."""
    H, N = w2.shape
    w2p = jnp.zeros((H, _NPAD), jnp.float32).at[:, :N].set(w2.astype(jnp.float32))
    b2p = jnp.zeros((1, _NPAD), jnp.float32).at[:, :N].set(
        jnp.reshape(b2, (1, -1)).astype(jnp.float32))
    return w1, jnp.reshape(b1, (1, -1)), w2p, b2p, N


def sreg_forward_coord(x, w1, b1_row, w2p, b2p, n_out, min_center, *, block_b=2048):
    """x: [B, C] backbone features -> [B, n_out] coordinates."""
    B, C = x.shape
    H = w1.shape[1]

    # First-layer weight follows the streamed activation dtype (bf16 halves the
    # dominant HBM stream); MXU accumulates in f32 either way.
    w1 = w1.astype(x.dtype)

    # Batch tiling: >=2 grid steps when B > 8 so both v7x TensorCores get work;
    # block dims stay multiples of 8 (or full-extent). No jnp.pad of x — the
    # ragged last block is handled by Pallas.
    if B <= 8:
        tb = B
    else:
        half = _round_up(pl.cdiv(B, 2), 8)
        tb = max(8, min(_round_up(block_b, 8), half))
    grid = (pl.cdiv(B, tb),)

    mc = jnp.full((1, 1), min_center, jnp.float32)  # SMEM scalar -> no recompile per value

    x_itemsize = jnp.dtype(x.dtype).itemsize
    x_bytes = B * C * x_itemsize
    w_bytes = C * H * jnp.dtype(w1.dtype).itemsize + H * 4 + H * _NPAD * 4 + _NPAD * 4
    out_bytes = B * _NPAD * 4
    flops = 2 * B * C * H + 2 * B * H * _NPAD

    # Weights never re-fetch (constant index maps). If they are large (realistic
    # backbone widths), keep a single buffer and budget VMEM under v7x's 64 MiB.
    single_buf_weights = w_bytes > (4 << 20)

    def _wspec(shape):
        if single_buf_weights:
            return pl.BlockSpec(shape, lambda i: (0, 0), pipeline_mode=pl.Buffered(1))
        return pl.BlockSpec(shape, lambda i: (0, 0))

    resident = (w_bytes * (1 if single_buf_weights else 2)
                + 2 * tb * C * x_itemsize + 2 * tb * _NPAD * 4)
    cp_kwargs = dict(dimension_semantics=("parallel",))
    if resident > (28 << 20):
        cp_kwargs["vmem_limit_bytes"] = int(min(resident + (4 << 20), 60 << 20))

    out = pl.pallas_call(
        _sreg_head_kernel,
        out_shape=jax.ShapeDtypeStruct((B, _NPAD), jnp.float32),
        grid=grid,
        in_specs=[
            pl.BlockSpec(memory_space=pltpu.MemorySpace.SMEM),   # min_center scalar
            pl.BlockSpec((tb, C), lambda i: (i, 0)),             # x: streamed row tiles
            _wspec((C, H)),                                      # w1: VMEM-resident
            _wspec((1, H)),                                      # b1: VMEM-resident
            _wspec((H, _NPAD)),                                  # w2 (8-wide): resident
            _wspec((1, _NPAD)),                                  # b2 (8-wide): resident
        ],
        out_specs=pl.BlockSpec((tb, _NPAD), lambda i: (i, 0)),
        compiler_params=pltpu.CompilerParams(**cp_kwargs),
        cost_estimate=pl.CostEstimate(flops=flops, transcendentals=0,
                                      bytes_accessed=x_bytes + w_bytes + out_bytes),
    )(mc, x, w1, b1_row, w2p, b2p)

    return out[:, :n_out]


def make_params(key, in_channels):
    """Deterministic synthetic parameters matching nn.Linear shapes (stored as (in, out) == W.T)."""
    k1, k2, k3, k4 = jax.random.split(key, 4)
    hidden = in_channels * 2
    w1 = jax.random.normal(k1, (in_channels, hidden), jnp.float32) * 0.05
    b1 = jax.random.normal(k2, (1, hidden), jnp.float32) * 0.05
    w2 = jax.random.normal(k3, (hidden, 3), jnp.float32) * 0.05
    b2 = jax.random.normal(k4, (1, 3), jnp.float32) * 0.05
    return w1, b1, w2, b2


def reference_forward_coord(x, w1, b1, w2, b2, min_center):
    h = jnp.maximum(x @ w1 + b1, 0.0)
    y = jnp.maximum(h @ w2 + b2, 0.0)
    return y + min_center


if __name__ == "__main__":
    key = jax.random.PRNGKey(0)
    kx, kp, kx2 = jax.random.split(key, 3)

    B = 8              # batch
    in_channels = 32   # backbone feature width
    crop_size = 16
    min_center = crop_size // 2   # matches SRegHead.__init__

    # Backbone output features (backbone == identity, see TODO above).
    x = jax.random.normal(kx, (B, in_channels), jnp.float32)
    w1, b1, w2, b2 = make_params(kp, in_channels)
    w1p, b1r, w2p, b2p, n_out = prepare_params(w1, b1, w2, b2)   # hoisted once

    out = jax.block_until_ready(
        sreg_forward_coord(x, w1p, b1r, w2p, b2p, n_out, min_center))
    ref = reference_forward_coord(x, w1, b1, w2, b2, min_center)
    assert out.shape == (B, 3), out.shape
    assert jnp.allclose(out, ref, atol=1e-5, rtol=1e-5), "mismatch vs reference"

    # Ragged batch, no jnp.pad: default tiling gives >=2 grid steps (v7x TCs).
    x2 = jax.random.normal(kx2, (20, in_channels), jnp.float32)
    out2 = jax.block_until_ready(
        sreg_forward_coord(x2, w1p, b1r, w2p, b2p, n_out, min_center))
    ref2 = reference_forward_coord(x2, w1, b1, w2, b2, min_center)
    assert out2.shape == (20, 3), out2.shape
    assert jnp.allclose(out2, ref2, atol=1e-5, rtol=1e-5), "mismatch vs reference (ragged)"

    # Small explicit tile -> 3-step grid with a masked boundary block.
    out3 = jax.block_until_ready(
        sreg_forward_coord(x2, w1p, b1r, w2p, b2p, n_out, min_center, block_b=8))
    assert jnp.allclose(out3, ref2, atol=1e-5, rtol=1e-5), "mismatch vs reference (gridded)"

    # bf16 streamed activations (halves the dominant input stream); f32 accumulate.
    out_bf = jax.block_until_ready(
        sreg_forward_coord(x2.astype(jnp.bfloat16), w1p, b1r, w2p, b2p, n_out, min_center))
    assert jnp.allclose(out_bf, ref2, atol=5e-2, rtol=2e-2), "mismatch vs reference (bf16)"

    print("KERNEL_OK")
</pallas_src>

<mosaic_0001>
module attributes {stable_mosaic.version = 11 : i64} {
  func.func @_sreg_head_kernel(%arg0: i32, %arg1: memref<1x1xf32, #tpu.memory_space<smem>>, %arg2: memref<8x32xf32, #tpu.memory_space<vmem>>, %arg3: memref<32x64xf32, #tpu.memory_space<vmem>>, %arg4: memref<1x64xf32, #tpu.memory_space<vmem>>, %arg5: memref<64x8xf32, #tpu.memory_space<vmem>>, %arg6: memref<1x8xf32, #tpu.memory_space<vmem>>, %arg7: memref<8x8xf32, #tpu.memory_space<vmem>>) attributes {dimension_semantics = [#tpu.dimension_semantics<parallel>], iteration_bounds = array<i64: 1>, scalar_prefetch = 0 : i64, scratch_operands = 0 : i64, tpu.core_type = #tpu.core_type<tc>, window_params = [{transform_indices = @transform_0, window_bounds = array<i64: 1, 1>}, {transform_indices = @transform_1, window_bounds = array<i64: 8, 32>}, {pipeline_mode = #tpu.pipeline_mode<synchronous>, transform_indices = @transform_2, window_bounds = array<i64: 32, 64>}, {pipeline_mode = #tpu.pipeline_mode<synchronous>, transform_indices = @transform_3, window_bounds = array<i64: 1, 64>}, {pipeline_mode = #tpu.pipeline_mode<synchronous>, transform_indices = @transform_4, window_bounds = array<i64: 64, 8>}, {pipeline_mode = #tpu.pipeline_mode<synchronous>, transform_indices = @transform_5, window_bounds = array<i64: 1, 8>}, {transform_indices = @transform_6, window_bounds = array<i64: 8, 8>}]} {
    %c0 = arith.constant 0 : index
    %c0_0 = arith.constant 0 : index
    %0 = vector.load %arg2[%c0, %c0_0] : memref<8x32xf32, #tpu.memory_space<vmem>>, vector<8x32xf32>
    %c0_1 = arith.constant 0 : index
    %c0_2 = arith.constant 0 : index
    %1 = vector.load %arg3[%c0_1, %c0_2] : memref<32x64xf32, #tpu.memory_space<vmem>>, vector<32x64xf32>
    %cst = arith.constant dense<0.000000e+00> : vector<8x64xf32>
    %2 = tpu.matmul %0, %1, %cst {dimension_numbers = #tpu.dot_dimension_numbers<[1], [0], [0], [1], [0, 0, 1, 1], [], []>} : vector<8x32xf32>, vector<32x64xf32>, vector<8x64xf32> -> vector<8x64xf32>
    %c0_3 = arith.constant 0 : index
    %c0_4 = arith.constant 0 : index
    %3 = vector.load %arg4[%c0_3, %c0_4] : memref<1x64xf32, #tpu.memory_space<vmem>>, vector<1x64xf32>
    %4 = vector.broadcast %3 : vector<1x64xf32> to vector<8x64xf32>
    %5 = arith.addf %2, %4 : vector<8x64xf32>
    %cst_5 = arith.constant 0.000000e+00 : f32
    %6 = vector.broadcast %cst_5 : f32 to vector<8x64xf32>
    %7 = arith.maximumf %5, %6 : vector<8x64xf32>
    %c0_6 = arith.constant 0 : index
    %c0_7 = arith.constant 0 : index
    %8 = vector.load %arg5[%c0_6, %c0_7] : memref<64x8xf32, #tpu.memory_space<vmem>>, vector<64x8xf32>
    %cst_8 = arith.constant dense<0.000000e+00> : vector<8x8xf32>
    %9 = tpu.matmul %7, %8, %cst_8 {dimension_numbers = #tpu.dot_dimension_numbers<[1], [0], [0], [1], [0, 0, 1, 1], [], []>} : vector<8x64xf32>, vector<64x8xf32>, vector<8x8xf32> -> vector<8x8xf32>
    %c0_9 = arith.constant 0 : index
    %c0_10 = arith.constant 0 : index
    %10 = vector.load %arg6[%c0_9, %c0_10] : memref<1x8xf32, #tpu.memory_space<vmem>>, vector<1x8xf32>
    %11 = vector.broadcast %10 : vector<1x8xf32> to vector<8x8xf32>
    %12 = arith.addf %9, %11 : vector<8x8xf32>
    %cst_11 = arith.constant 0.000000e+00 : f32
    %13 = vector.broadcast %cst_11 : f32 to vector<8x8xf32>
    %14 = arith.maximumf %12, %13 : vector<8x8xf32>
    %c0_12 = arith.constant 0 : index
    %c0_13 = arith.constant 0 : index
    %15 = memref.load %arg1[%c0_12, %c0_13] : memref<1x1xf32, #tpu.memory_space<smem>>
    %16 = vector.broadcast %15 : f32 to vector<8x8xf32>
    %17 = arith.addf %14, %16 : vector<8x8xf32>
    %c0_14 = arith.constant 0 : index
    %c0_15 = arith.constant 0 : index
    %18 = vector.load %arg7[%c0_14, %c0_15] : memref<8x8xf32, #tpu.memory_space<vmem>>, vector<8x8xf32>
    tpu.vector_store %arg7[%c0_14, %c0_15], %17 {strides = array<i32>} : memref<8x8xf32, #tpu.memory_space<vmem>>, vector<8x8xf32>,
    return
  }
  func.func @transform_0(%arg0: i32) -> (i32, i32) {
    %c0_i32 = arith.constant 0 : i32
    %c0_i32_0 = arith.constant 0 : i32
    %c0_i32_1 = arith.constant 0 : i32
    return %c0_i32, %c0_i32_0 : i32, i32
  }
  func.func @transform_1(%arg0: i32) -> (i32, i32) {
    %c0_i32 = arith.constant 0 : i32
    %c0_i32_0 = arith.constant 0 : i32
    return %arg0, %c0_i32 : i32, i32
  }
  func.func @transform_2(%arg0: i32) -> (i32, i32) {
    %c0_i32 = arith.constant 0 : i32
    %c0_i32_0 = arith.constant 0 : i32
    %c0_i32_1 = arith.constant 0 : i32
    return %c0_i32, %c0_i32_0 : i32, i32
  }
  func.func @transform_3(%arg0: i32) -> (i32, i32) {
    %c0_i32 = arith.constant 0 : i32
    %c0_i32_0 = arith.constant 0 : i32
    %c0_i32_1 = arith.constant 0 : i32
    return %c0_i32, %c0_i32_0 : i32, i32
  }
  func.func @transform_4(%arg0: i32) -> (i32, i32) {
    %c0_i32 = arith.constant 0 : i32
    %c0_i32_0 = arith.constant 0 : i32
    %c0_i32_1 = arith.constant 0 : i32
    return %c0_i32, %c0_i32_0 : i32, i32
  }
  func.func @transform_5(%arg0: i32) -> (i32, i32) {
    %c0_i32 = arith.constant 0 : i32
    %c0_i32_0 = arith.constant 0 : i32
    %c0_i32_1 = arith.constant 0 : i32
    return %c0_i32, %c0_i32_0 : i32, i32
  }
  func.func @transform_6(%arg0: i32) -> (i32, i32) {
    %c0_i32 = arith.constant 0 : i32
    %c0_i32_0 = arith.constant 0 : i32
    return %arg0, %c0_i32 : i32, i32
  }
}

</mosaic_0001>

<llo_original>
// kernel: tpu_custom_call.1
$region0: #{tpu_custom_call.1}
  #allocation0 [shape = 'u32[]', space=smem, size = 0x4, offset = 0x4, fixed_abs, tag = 'smem constant byte address 0x4 - core index']
  #allocation1 [shape = 'u32[144,128]{1,0:T(1,128)}', space=vmem, size = 0x12000, scoped, tag = 'internal scratch']
  #allocation2 [shape = 'f32[1,1]{1,0:T(1,128)S(6)}', space=smem, size = 0x200, scoped, tag = 'scoped memory for tpu_custom_call.1']
  %s0 = inlined_call_operand.<no memory space> [shape: f32[1,1], index: 0, kind: input, shape index: {}]
  %s1 = inlined_call_operand.vmem [shape: f32[8,32], index: 1, kind: input, shape index: {}]
  %s2 = inlined_call_operand.vmem [shape: f32[32,64], index: 2, kind: input, shape index: {}]
  %s3 = inlined_call_operand.vmem [shape: f32[1,64], index: 3, kind: input, shape index: {}]
  %s4 = inlined_call_operand.vmem [shape: f32[64,8], index: 4, kind: input, shape index: {}]
  %s5 = inlined_call_operand.vmem [shape: f32[1,8], index: 5, kind: input, shape index: {}]
  %s6 = inlined_call_operand.hbm [shape: f32[8,8], index: 6, kind: output, shape index: {}]
  %s7 = sld [smem:[#allocation0]]
  $region34: #{tpu_custom_call.1} parent=0
    _
  %s9 = ssub.s32 1, %s7
  %s10 = scalar_select 0, %s9, %s7
  %11 = sst [smem:[#allocation2]] %s0
  $region1: #{tpu_custom_call.1} parent=0
    #allocation3 [shape = 'u8[4096]{0}', space=vmem, size = 0x1000, scoped, tag = 'output window, operand 0, single buffered']
    #allocation4 [shape = 's32[1]{0}', space=sflag, size = 0x4, scoped, tag = 'scoped memory for tpu_custom_call.1']
    %12 = vsyncpa [#allocation4], 0
    // Predicated region
    $region2: #{tpu_custom_call.1} parent=1 // pred_check
      _
    $region3: #{tpu_custom_call.1} parent=1 // pred_check_branch
      %14 = sbr.rel (0) target = $region5
    $region4: #{tpu_custom_call.1} parent=1 // pred_region
      _
    $region5: #{tpu_custom_call.1} parent=1 // pred_fallthru
      _
    // Predicated region
    $region6: #{tpu_custom_call.1} parent=1 // pred_check
      _
    $region7: #{tpu_custom_call.1} parent=1 // pred_check_branch
      %16 = sbr.rel (0) target = $region9
    $region8: #{tpu_custom_call.1} parent=1 // pred_region
      _
    $region9: #{tpu_custom_call.1} parent=1 // pred_fallthru
      _
    // Predicated region
    $region10: #{tpu_custom_call.1} parent=1 // pred_check
      _
    $region11: #{tpu_custom_call.1} parent=1 // pred_check_branch
      %18 = sbr.rel (0) target = $region13
    $region12: #{tpu_custom_call.1} parent=1 // pred_region
      _
    $region13: #{tpu_custom_call.1} parent=1 // pred_fallthru
      _
    // Predicated region
    $region14: #{tpu_custom_call.1} parent=1 // pred_check
      _
    $region15: #{tpu_custom_call.1} parent=1 // pred_check_branch
      %20 = sbr.rel (0) target = $region17
    $region16: #{tpu_custom_call.1} parent=1 // pred_region
      _
    $region17: #{tpu_custom_call.1} parent=1 // pred_fallthru
      _
    // Predicated region
    $region18: #{tpu_custom_call.1} parent=1 // pred_check
      _
    $region19: #{tpu_custom_call.1} parent=1 // pred_check_branch
      %22 = sbr.rel (0) target = $region21
    $region20: #{tpu_custom_call.1} parent=1 // pred_region
      _
    $region21: #{tpu_custom_call.1} parent=1 // pred_fallthru
      _
    // Predicated region
    $region22: #{tpu_custom_call.1} parent=1 // pred_check
      _
    $region23: #{tpu_custom_call.1} parent=1 // pred_check_branch
      %24 = sbr.rel (0) target = $region25
    $region24: #{tpu_custom_call.1} parent=1 // pred_region
      _
    $region25: #{tpu_custom_call.1} parent=1 // pred_fallthru
      _
    %v25 = vld [vmem:[%s1] sm:$0xff]
    %v26 = vld [vmem:[%s2] sm:$0xff]
    %v27 = vld [vmem:[%s2 + $0x8] sm:$0xff]
    %v28 = vld [vmem:[%s2 + $0x10] sm:$0xff]
    %v29 = vld [vmem:[%s2 + $0x18] sm:$0xff]
    %v30 = vld [vmem:[%s3] sm:$0x1]
    %v32 = vlaneseq
    %v33 = vshrl.u32 %v32, 7
    %v34 = vsub.s32 0, %v33
    %v35 = vrot.slane %v30, %v34
    %vm37 = vcmask 261120
    %v39 = vsel %vm37, %v25, 0
    %41 = vmatprep.subr.mxu0 0.0
    %42 = vmatpush1.msra.mxu0 %v26
    %43 = vmatprep.subr.mxu0 0.0
    %44 = vmatpush1.msra.mxu0 %v27
    %45 = vmatprep.subr.mxu0 0.0
    %46 = vmatpush1.msra.mxu0 %v28
    %47 = vmatprep.subr.mxu0 0.0
    %48 = vmatpush1.msra.mxu0 %v29
    %49 = vmatprep.subr.mxu0 0.0
    %50 = vmatpush1.msra.mxu0 0.0
    %51 = vmatprep.subr.mxu0 0.0
    %52 = vmatpush1.msra.mxu0 0.0
    %53 = vmatprep.subr.mxu0 0.0
    %54 = vmatpush1.msra.mxu0 0.0
    %55 = vmatprep.subr.mxu0 0.0
    %56 = vmatpush1.msra.mxu0 0.0
    %57 = vmatprep.subr.mxu0 0.0
    %58 = vmatpush1.msra.mxu0 0.0
    %59 = vmatprep.subr.mxu0 0.0
    %60 = vmatpush1.msra.mxu0 0.0
    %61 = vmatprep.subr.mxu0 0.0
    %62 = vmatpush1.msra.mxu0 0.0
    %63 = vmatprep.subr.mxu0 0.0
    %64 = vmatpush1.msra.mxu0 0.0
    %65 = vmatprep.subr.mxu0 0.0
    %66 = vmatpush1.msra.mxu0 0.0
    %67 = vmatprep.subr.mxu0 0.0
    %68 = vmatpush1.msra.mxu0 0.0
    %69 = vmatprep.subr.mxu0 0.0
    %70 = vmatpush1.msra.mxu0 0.0
    %71 = vmatprep.subr.mxu0 0.0
    %72 = vmatpush1.msra.mxu0 0.0
    %73 = vmatprep.subr.mxu0 0.0
    %74 = vmatpush1.msra.mxu0 0.0
    %75 = vmatprep.subr.mxu0 0.0
    %76 = vmatpush1.msra.mxu0 0.0
    %77 = vmatprep.subr.mxu0 0.0
    %78 = vmatpush1.msra.mxu0 0.0
    %79 = vmatprep.subr.mxu0 0.0
    %80 = vmatpush1.msra.mxu0 0.0
    %81 = vmatprep.subr.mxu0 0.0
    %82 = vmatpush1.msra.mxu0 0.0
    %83 = vmatprep.subr.mxu0 0.0
    %84 = vmatpush1.msra.mxu0 0.0
    %85 = vmatprep.subr.mxu0 0.0
    %86 = vmatpush1.msra.mxu0 0.0
    %87 = vmatprep.subr.mxu0 0.0
    %88 = vmatpush1.msra.mxu0 0.0
    %89 = vmatprep.subr.mxu0 0.0
    %90 = vmatpush1.msra.mxu0 0.0
    %91 = vmatprep.subr.mxu0 0.0
    %92 = vmatpush1.msra.mxu0 0.0
    %93 = vmatprep.subr.mxu0 0.0
    %94 = vmatpush1.msra.mxu0 0.0
    %95 = vmatprep.subr.mxu0 0.0
    %96 = vmatpush1.msra.mxu0 0.0
    %97 = vmatprep.subr.mxu0 0.0
    %98 = vmatpush1.msra.mxu0 0.0
    %99 = vmatprep.subr.mxu0 0.0
    %100 = vmatpush1.msra.mxu0 0.0
    %101 = vmatprep.subr.mxu0 0.0
    %102 = vmatpush1.msra.mxu0 0.0
    %103 = vmatprep.subr.mxu0 0.0
    %104 = vmatpush1.msra.mxu0 0.0
    %105 = vmatprep.mubr.f32.mxu0 0.0
    %106 = vmatmul.mubr.f32.gmra.mrb[0].mxu0 %v39
    %v107 = vpop.f32.mrb[0].mxu0
    %v108 = vadd.f32 %v35, %v107
    %v109 = vpop.f32.mrb[0].mxu0
    %110 = vdwg.mxu0
    %v111 = vmax.f32 %v108, 0.0
    %v112 = vld [vmem:[%s4] sm:$0xff]
    %v113 = vld [vmem:[%s4 + $0x8] sm:$0xff]
    %v114 = vld [vmem:[%s4 + $0x10] sm:$0xff]
    %v115 = vld [vmem:[%s4 + $0x18] sm:$0xff]
    %v116 = vld [vmem:[%s4 + $0x20] sm:$0xff]
    %v117 = vld [vmem:[%s4 + $0x28] sm:$0xff]
    %v118 = vld [vmem:[%s4 + $0x30] sm:$0xff]
    %v119 = vld [vmem:[%s4 + $0x38] sm:$0xff]
    %v120 = vld [vmem:[%s5] sm:$0x1]
    %v122 = vlaneseq
    %v123 = vshrl.u32 %v122, 7
    %v124 = vsub.s32 0, %v123
    %v125 = vrot.slane %v120, %v124
    %vm127 = vcmask 523264
    %v129 = vsel %vm127, %v111, 0
    %131 = vmatprep.subr.mxu0 0.0
    %132 = vmatpush1.msra.mxu0 %v112
    %133 = vmatprep.subr.mxu0 0.0
    %134 = vmatpush1.msra.mxu0 %v113
    %135 = vmatprep.subr.mxu0 0.0
    %136 = vmatpush1.msra.mxu0 %v114
    %137 = vmatprep.subr.mxu0 0.0
    %138 = vmatpush1.msra.mxu0 %v115
    %139 = vmatprep.subr.mxu0 0.0
    %140 = vmatpush1.msra.mxu0 %v116
    %141 = vmatprep.subr.mxu0 0.0
    %142 = vmatpush1.msra.mxu0 %v117
    %143 = vmatprep.subr.mxu0 0.0
    %144 = vmatpush1.msra.mxu0 %v118
    %145 = vmatprep.subr.mxu0 0.0
    %146 = vmatpush1.msra.mxu0 %v119
    %147 = vmatprep.subr.mxu0 0.0
    %148 = vmatpush1.msra.mxu0 0.0
    %149 = vmatprep.subr.mxu0 0.0
    %150 = vmatpush1.msra.mxu0 0.0
    %151 = vmatprep.subr.mxu0 0.0
    %152 = vmatpush1.msra.mxu0 0.0
    %153 = vmatprep.subr.mxu0 0.0
    %154 = vmatpush1.msra.mxu0 0.0
    %155 = vmatprep.subr.mxu0 0.0
    %156 = vmatpush1.msra.mxu0 0.0
    %157 = vmatprep.subr.mxu0 0.0
    %158 = vmatpush1.msra.mxu0 0.0
    %159 = vmatprep.subr.mxu0 0.0
    %160 = vmatpush1.msra.mxu0 0.0
    %161 = vmatprep.subr.mxu0 0.0
    %162 = vmatpush1.msra.mxu0 0.0
    %163 = vmatprep.subr.mxu0 0.0
    %164 = vmatpush1.msra.mxu0 0.0
    %165 = vmatprep.subr.mxu0 0.0
    %166 = vmatpush1.msra.mxu0 0.0
    %167 = vmatprep.subr.mxu0 0.0
    %168 = vmatpush1.msra.mxu0 0.0
    %169 = vmatprep.subr.mxu0 0.0
    %170 = vmatpush1.msra.mxu0 0.0
    %171 = vmatprep.subr.mxu0 0.0
    %172 = vmatpush1.msra.mxu0 0.0
    %173 = vmatprep.subr.mxu0 0.0
    %174 = vmatpush1.msra.mxu0 0.0
    %175 = vmatprep.subr.mxu0 0.0
    %176 = vmatpush1.msra.mxu0 0.0
    %177 = vmatprep.subr.mxu0 0.0
    %178 = vmatpush1.msra.mxu0 0.0
    %179 = vmatprep.subr.mxu0 0.0
    %180 = vmatpush1.msra.mxu0 0.0
    %181 = vmatprep.subr.mxu0 0.0
    %182 = vmatpush1.msra.mxu0 0.0
    %183 = vmatprep.subr.mxu0 0.0
    %184 = vmatpush1.msra.mxu0 0.0
    %185 = vmatprep.subr.mxu0 0.0
    %186 = vmatpush1.msra.mxu0 0.0
    %187 = vmatprep.subr.mxu0 0.0
    %188 = vmatpush1.msra.mxu0 0.0
    %189 = vmatprep.subr.mxu0 0.0
    %190 = vmatpush1.msra.mxu0 0.0
    %191 = vmatprep.subr.mxu0 0.0
    %192 = vmatpush1.msra.mxu0 0.0
    %193 = vmatprep.subr.mxu0 0.0
    %194 = vmatpush1.msra.mxu0 0.0
    %195 = vmatprep.mubr.f32.mxu0 0.0
    %196 = vmatmul.mubr.f32.gmra.mrb[0].mxu0 %v129
    %v197 = vpop.f32.mrb[0].mxu0
    %v198 = vadd.f32 %v125, %v197
    %v199 = vpop.f32.mrb[0].mxu0
    %200 = vdwg.mxu0
    %v201 = vmax.f32 %v198, 0.0
    %s202 = sld [smem:[#allocation2]]
    %v203 = vstv %s202
    %v204 = vadd.f32 %v201, %v203
    %vm205 = vcmask 64512
    %206 = vst.msk [vmem:[#allocation3] sm:$0xff] %vm205, %v204
    // Predicated region
    $region26: #{tpu_custom_call.1} parent=1 // pred_check
      _
    $region27: #{tpu_custom_call.1} parent=1 // pred_check_branch
      %208 = sbr.rel (0) target = $region29
    $region28: #{tpu_custom_call.1} parent=1 // pred_region
      %s210 = ssub.s32 128, 128
      %211 = vsyncadd [#allocation4], %s210
      %s213 = sshll.u32 [#allocation3], 4
      %s214 = int_to_ptr.vmem [resolvable:$true] %s213
      %216 = dma.vmem_to_hbm [thread:$0]  %s214, 128, %s6, [#allocation4]
    $region29: #{tpu_custom_call.1} parent=1 // pred_fallthru
      _
    // Predicated region
    $region30: #{tpu_custom_call.1} parent=1 // pred_check
      _
    $region31: #{tpu_custom_call.1} parent=1 // pred_check_branch
      %218 = sbr.rel (0) target = $region33
    $region32: #{tpu_custom_call.1} parent=1 // pred_region
      %219 = dma.done [#allocation4], 128
    $region33: #{tpu_custom_call.1} parent=1 // pred_fallthru
      _
    %220 = vsyncpa [#allocation4], 1

</llo_original>
